<compile_context>
chip_gen: v7x
topology: tpu7x:2x2x1
jax: 0.10.0
libtpu: 0.0.40
codegen_flags: <defaults>
</compile_context>

<pallas_src>
import functools

import jax
import jax.numpy as jnp
from jax.experimental import pallas as pl
from jax.experimental.pallas import tpu as pltpu

EPS = 1e-6


# ----------------------------------------------------------------------------
# Kernels: o = x + a_2 * (s - mean(s)) / (std_unbiased(s) + eps) + b_2
# ----------------------------------------------------------------------------
def _ln_residual_kernel(x_ref, sub_ref, a_ref, b_ref, o_ref):
    """Feature axis == lane axis (d >= 128, or un-packable d)."""
    s = sub_ref[...].astype(jnp.float32)                 # (tile, d)
    d = s.shape[-1]
    mean = jnp.sum(s, axis=-1, keepdims=True) * (1.0 / d)
    dev = s - mean                                       # two-pass: torch-accurate
    var = jnp.sum(dev * dev, axis=-1, keepdims=True) * (1.0 / (d - 1))
    inv = pl.reciprocal(jnp.sqrt(var) + EPS, approx=False)
    normed = dev * (inv * a_ref[...]) + b_ref[...]
    xv = x_ref[...]                                      # residual in native dtype
    o_ref[...] = (xv + normed.astype(xv.dtype)).astype(o_ref.dtype)


def _segsum(v, seg_bf16):
    """Segmented lane-sum via block-diagonal 0/1 matmul on the MXU.

    hi/lo bf16 split keeps ~f32 accuracy regardless of MXU input precision
    (two explicit bf16 passes, f32 accumulation)."""
    hi = v.astype(jnp.bfloat16)
    lo = (v - hi.astype(jnp.float32)).astype(jnp.bfloat16)
    return (jnp.dot(hi, seg_bf16, preferred_element_type=jnp.float32)
            + jnp.dot(lo, seg_bf16, preferred_element_type=jnp.float32))


def _ln_residual_packed_kernel(x_ref, sub_ref, a_ref, b_ref, seg_ref, o_ref, *, d):
    """Lane-dense path: g = 128//d original rows packed per 128-lane row."""
    s = sub_ref[...].astype(jnp.float32)                 # (tile, 128)
    seg = seg_ref[...]                                   # (128, 128) block-diag 0/1
    mean = _segsum(s, seg) * (1.0 / d)                   # broadcast within segment
    dev = s - mean
    var = _segsum(dev * dev, seg) * (1.0 / (d - 1))
    inv = pl.reciprocal(jnp.sqrt(var) + EPS, approx=False)
    normed = dev * (inv * a_ref[...]) + b_ref[...]
    xv = x_ref[...]
    o_ref[...] = (xv + normed.astype(xv.dtype)).astype(o_ref.dtype)


# ----------------------------------------------------------------------------
# Wrapper
# ----------------------------------------------------------------------------
def _vmem_info():
    phys = 64 << 20                      # conservative fallback = v7x physical VMEM
    try:
        phys = int(getattr(pltpu.get_tpu_info(), "vmem_capacity_bytes", phys)) or phys
    except Exception:
        pass
    budget = int(phys * 0.70)            # ~45 MiB on v7x (64 MiB), ~90 MiB on v5e/v6e (128 MiB)
    return phys, budget


def _sublayer_connection_pallas(x2d, sub2d, a_2, b_2, *, tile_rows=None):
    rows, d = x2d.shape
    assert d >= 2, "feature dim must be >= 2 (unbiased std divides by D-1)"
    out_dtype = x2d.dtype
    isx = jnp.dtype(x2d.dtype).itemsize
    iss = jnp.dtype(sub2d.dtype).itemsize

    a32 = jnp.asarray(a_2, jnp.float32).reshape(1, d)
    b32 = jnp.asarray(b_2, jnp.float32).reshape(1, d)

    # Lane-dense repack when d < 128: fold g consecutive rows per 128-lane row.
    g = 128 // d if (d < 128 and 128 % d == 0) else 1
    packed = (g > 1) and (rows % g == 0) and (rows >= g)
    if packed:
        d_eff, rows_eff = d * g, rows // g
        x_in = x2d.reshape(rows_eff, d_eff)              # free row-major reshape
        sub_in = sub2d.reshape(rows_eff, d_eff)
        a_in = jnp.tile(a32, (1, g))
        b_in = jnp.tile(b32, (1, g))
        lane_seg = jnp.arange(d_eff) // d
        seg = (lane_seg[:, None] == lane_seg[None, :]).astype(jnp.bfloat16)
        kernel = functools.partial(_ln_residual_packed_kernel, d=d)
        extra_in = (seg,)
        extra_specs = [pl.BlockSpec((d_eff, d_eff), lambda i: (0, 0))]
    else:
        d_eff, rows_eff = d, rows
        x_in, sub_in, a_in, b_in = x2d, sub2d, a32, b32
        kernel = _ln_residual_kernel
        extra_in = ()
        extra_specs = []

    phys, budget = _vmem_info()
    # Sublane packing for the row-tile dim (8 rows/vreg for 4B, 16 for bf16).
    packing = 8 * max(1, 4 // min(isx, iss))
    # Per-row VMEM bytes: double-buffered x/sub/out streams + ~4 f32 temporaries
    # materialized by the in-kernel math (covers bf16->f32 upcasts too).
    per_row = d_eff * (2 * (2 * isx + iss) + 16)
    cap = max(packing, budget // max(per_row, 1))
    tile = min(rows_eff, cap if tile_rows is None else tile_rows)
    if tile < rows_eff:
        tile = max(packing, (tile // packing) * packing)
        tile = min(tile, rows_eff)
    # Ragged last block is masked by Pallas (row-wise math => garbage rows are
    # never stored), so no jnp.pad / output-slice HBM copies are needed.
    nb = (rows_eff + tile - 1) // tile

    vmem_usage = tile * per_row + 4 * d_eff * 4 + d_eff * d_eff * 2 + (2 << 20)
    vmem_limit = int(min(int(phys * 0.9), max(32 << 20, vmem_usage)))

    row_spec = pl.BlockSpec((tile, d_eff), lambda i: (i, 0))
    param_spec = pl.BlockSpec((1, d_eff), lambda i: (0, 0))
    mxu_flops = (4 * 2 * rows_eff * d_eff * d_eff) if packed else 0

    out = pl.pallas_call(
        kernel,
        out_shape=jax.ShapeDtypeStruct((rows_eff, d_eff), out_dtype),
        grid=(nb,),
        in_specs=[row_spec, row_spec, param_spec, param_spec] + extra_specs,
        out_specs=row_spec,
        # x is dead after this kernel and matches the output shape/dtype exactly:
        # reuse its HBM buffer for the output (XLA inserts a copy if it can't).
        input_output_aliases={0: 0},
        compiler_params=pltpu.CompilerParams(
            # TODO(synk): on v7x confirm a single "parallel" row axis shards the
            # DMA across both TensorCores; if not, switch to pltpu.CORE_PARALLEL
            # or a pl.core_map over a tensorcore mesh.
            dimension_semantics=("parallel",),
            vmem_limit_bytes=vmem_limit),
        cost_estimate=pl.CostEstimate(
            flops=10 * rows_eff * d_eff + mxu_flops,
            transcendentals=2 * rows_eff * d_eff,
            bytes_accessed=rows_eff * d_eff * (2 * isx + iss)),
    )(x_in, sub_in, a_in, b_in, *extra_in)

    return out.reshape(rows, d) if packed else out


def sublayer_connection(x, sublayer, a_2, b_2):
    """SublayerConnection.forward (eval mode): x + LayerNorm(sublayer(x))."""
    sub_out = sublayer(x)
    # TODO(synk): training-mode dropout (pltpu.prng_* mask) not implemented;
    # eval-mode dropout is the identity, which is what is reproduced here.
    # TODO(synk): self_attn/src_attn/feed_forward are opaque injected modules,
    # so their final matmul cannot be fused; once they are Pallas matmuls the
    # LN+residual body should run as a @pl.when(k == K-1) epilogue on the
    # accumulator tile to remove the sub_out HBM round trip.
    b, s, d = x.shape
    out2d = _sublayer_connection_pallas(
        x.reshape(b * s, d), sub_out.reshape(b * s, d), a_2, b_2)
    return out2d.reshape(b, s, d)


def build_decoder_layer(self_attn, src_attn, feed_forward):
    """DecoderLayer.forward: three SublayerConnections (Figure 1 right)."""
    @jax.jit
    def forward(x, memory, src_mask, tgt_mask, ln_a, ln_b):
        m = memory
        x = sublayer_connection(
            x, lambda t: self_attn(t, t, t, tgt_mask), ln_a[0], ln_b[0])
        x = sublayer_connection(
            x, lambda t: src_attn(t, m, m, src_mask), ln_a[1], ln_b[1])
        x = sublayer_connection(x, feed_forward, ln_a[2], ln_b[2])
        return x
    return forward


# ----------------------------------------------------------------------------
# Pure-JAX reference mirroring the PyTorch code exactly.
# ----------------------------------------------------------------------------
def _layer_norm_ref(x, a_2, b_2, eps=EPS):
    mean = jnp.mean(x, axis=-1, keepdims=True)
    std = jnp.std(x, axis=-1, keepdims=True, ddof=1)     # unbiased, like torch
    return a_2 * (x - mean) / (std + eps) + b_2


def _decoder_layer_ref(x, memory, src_mask, tgt_mask, ln_a, ln_b,
                       self_attn, src_attn, feed_forward):
    m = memory
    x = x + _layer_norm_ref(self_attn(x, x, x, tgt_mask), ln_a[0], ln_b[0])
    x = x + _layer_norm_ref(src_attn(x, m, m, src_mask), ln_a[1], ln_b[1])
    x = x + _layer_norm_ref(feed_forward(x), ln_a[2], ln_b[2])
    return x


if __name__ == "__main__":
    key = jax.random.PRNGKey(0)
    keys = jax.random.split(key, 12)

    B, S_T, S_S, D, D_FF = 2, 8, 8, 32, 64

    x = jax.random.normal(keys[0], (B, S_T, D), dtype=jnp.float32)
    memory = jax.random.normal(keys[1], (B, S_S, D), dtype=jnp.float32)

    def init(k, shape, scale):
        return jax.random.normal(k, shape, dtype=jnp.float32) * scale

    # Deterministic stand-ins for the injected sublayer modules.
    sa_w = [init(keys[2 + i], (D, D), 1.0 / float(D) ** 0.5) for i in range(4)]
    ca_w = [init(keys[6 + i], (D, D), 1.0 / float(D) ** 0.5) for i in range(4)]
    ff_w1 = init(keys[10], (D, D_FF), 1.0 / float(D) ** 0.5)
    ff_w2 = init(keys[11], (D_FF, D), 1.0 / float(D_FF) ** 0.5)

    def make_attention(wq, wk, wv, wo):
        def attn(q, k, v, mask):
            d_k = q.shape[-1]
            qh, kh, vh = q @ wq, k @ wk, v @ wv
            scores = jnp.einsum("bqd,bkd->bqk", qh, kh) / jnp.sqrt(
                jnp.float32(d_k))
            scores = jnp.where(mask, scores, jnp.float32(-1e9))
            p = jax.nn.softmax(scores, axis=-1)
            return jnp.einsum("bqk,bkd->bqd", p, vh) @ wo
        return attn

    def feed_forward(t):
        return jax.nn.relu(t @ ff_w1) @ ff_w2

    self_attn = make_attention(*sa_w)
    src_attn = make_attention(*ca_w)

    tgt_mask = jnp.tril(jnp.ones((S_T, S_T), dtype=bool))[None]   # causal
    src_mask = jnp.ones((1, S_T, S_S), dtype=bool)

    # LayerNorm parameters: BOTH a_2 and b_2 initialized to ones, as in __init__.
    ln_a = jnp.ones((3, D), dtype=jnp.float32)
    ln_b = jnp.ones((3, D), dtype=jnp.float32)

    # --- full DecoderLayer forward vs reference (exercises the packed path) ---
    forward = build_decoder_layer(self_attn, src_attn, feed_forward)
    out = jax.block_until_ready(
        forward(x, memory, src_mask, tgt_mask, ln_a, ln_b))
    ref = _decoder_layer_ref(x, memory, src_mask, tgt_mask, ln_a, ln_b,
                             self_attn, src_attn, feed_forward)
    assert out.shape == (B, S_T, D)
    max_err = float(jnp.max(jnp.abs(out - ref)))
    assert jnp.allclose(out, ref, atol=2e-4, rtol=2e-4), max_err

    # --- extra coverage of both kernel paths (packed/unpacked, ragged grids) ---
    def _check(rows, d, tile_override, seed):
        kx, ks, ka, kb = jax.random.split(jax.random.PRNGKey(seed), 4)
        xt = jax.random.normal(kx, (rows, d), jnp.float32)
        st = jax.random.normal(ks, (rows, d), jnp.float32) * 1.7 + 0.3
        at = jax.random.normal(ka, (d,), jnp.float32)
        bt = jax.random.normal(kb, (d,), jnp.float32)
        got = jax.block_until_ready(
            _sublayer_connection_pallas(xt, st, at, bt, tile_rows=tile_override))
        want = xt + _layer_norm_ref(st, at, bt)
        err = float(jnp.max(jnp.abs(got - want)))
        assert got.shape == (rows, d) and err < 2e-4, (rows, d, tile_override, err)

    _check(80, 32, 8, 1)      # packed (g=4), ragged last block
    _check(40, 160, 16, 2)    # unpacked (d >= 128), ragged last block
    _check(10, 32, None, 3)   # d < 128 but rows % g != 0 -> unpacked fallback
    _check(16, 64, None, 4)   # packed (g=2), single full block

    print("KERNEL_OK")
</pallas_src>

<mosaic_0001>
module attributes {stable_mosaic.version = 11 : i64} {
  func.func @_ln_residual_packed_kernel(%arg0: i32, %arg1: memref<4x128xf32, #tpu.memory_space<vmem>>, %arg2: memref<4x128xf32, #tpu.memory_space<vmem>>, %arg3: memref<1x128xf32, #tpu.memory_space<vmem>>, %arg4: memref<1x128xf32, #tpu.memory_space<vmem>>, %arg5: memref<128x128xbf16, #tpu.memory_space<vmem>>, %arg6: memref<4x128xf32, #tpu.memory_space<vmem>>) attributes {dimension_semantics = [#tpu.dimension_semantics<parallel>], iteration_bounds = array<i64: 1>, scalar_prefetch = 0 : i64, scratch_operands = 0 : i64, tpu.core_type = #tpu.core_type<tc>, window_params = [{transform_indices = @transform_0, window_bounds = array<i64: 4, 128>}, {transform_indices = @transform_1, window_bounds = array<i64: 4, 128>}, {pipeline_mode = #tpu.pipeline_mode<synchronous>, transform_indices = @transform_2, window_bounds = array<i64: 1, 128>}, {pipeline_mode = #tpu.pipeline_mode<synchronous>, transform_indices = @transform_3, window_bounds = array<i64: 1, 128>}, {pipeline_mode = #tpu.pipeline_mode<synchronous>, transform_indices = @transform_4, window_bounds = array<i64: 128, 128>}, {transform_indices = @transform_5, window_bounds = array<i64: 4, 128>}]} {
    %c0 = arith.constant 0 : index
    %c0_0 = arith.constant 0 : index
    %0 = vector.load %arg2[%c0, %c0_0] : memref<4x128xf32, #tpu.memory_space<vmem>>, vector<4x128xf32>
    %c0_1 = arith.constant 0 : index
    %c0_2 = arith.constant 0 : index
    %1 = vector.load %arg5[%c0_1, %c0_2] : memref<128x128xbf16, #tpu.memory_space<vmem>>, vector<128x128xbf16>
    %2 = arith.truncf %0 : vector<4x128xf32> to vector<4x128xbf16>
    %3 = arith.extf %2 : vector<4x128xbf16> to vector<4x128xf32>
    %4 = arith.subf %0, %3 : vector<4x128xf32>
    %5 = arith.truncf %4 : vector<4x128xf32> to vector<4x128xbf16>
    %cst = arith.constant dense<0.000000e+00> : vector<4x128xf32>
    %6 = tpu.matmul %2, %1, %cst {dimension_numbers = #tpu.dot_dimension_numbers<[1], [0], [0], [1], [0, 0, 1, 1], [], []>} : vector<4x128xbf16>, vector<128x128xbf16>, vector<4x128xf32> -> vector<4x128xf32>
    %cst_3 = arith.constant dense<0.000000e+00> : vector<4x128xf32>
    %7 = tpu.matmul %5, %1, %cst_3 {dimension_numbers = #tpu.dot_dimension_numbers<[1], [0], [0], [1], [0, 0, 1, 1], [], []>} : vector<4x128xbf16>, vector<128x128xbf16>, vector<4x128xf32> -> vector<4x128xf32>
    %8 = arith.addf %6, %7 : vector<4x128xf32>
    %cst_4 = arith.constant 3.125000e-02 : f32
    %9 = vector.broadcast %cst_4 : f32 to vector<4x128xf32>
    %10 = arith.mulf %8, %9 : vector<4x128xf32>
    %11 = arith.subf %0, %10 : vector<4x128xf32>
    %12 = arith.mulf %11, %11 : vector<4x128xf32>
    %13 = arith.truncf %12 : vector<4x128xf32> to vector<4x128xbf16>
    %14 = arith.extf %13 : vector<4x128xbf16> to vector<4x128xf32>
    %15 = arith.subf %12, %14 : vector<4x128xf32>
    %16 = arith.truncf %15 : vector<4x128xf32> to vector<4x128xbf16>
    %cst_5 = arith.constant dense<0.000000e+00> : vector<4x128xf32>
    %17 = tpu.matmul %13, %1, %cst_5 {dimension_numbers = #tpu.dot_dimension_numbers<[1], [0], [0], [1], [0, 0, 1, 1], [], []>} : vector<4x128xbf16>, vector<128x128xbf16>, vector<4x128xf32> -> vector<4x128xf32>
    %cst_6 = arith.constant dense<0.000000e+00> : vector<4x128xf32>
    %18 = tpu.matmul %16, %1, %cst_6 {dimension_numbers = #tpu.dot_dimension_numbers<[1], [0], [0], [1], [0, 0, 1, 1], [], []>} : vector<4x128xbf16>, vector<128x128xbf16>, vector<4x128xf32> -> vector<4x128xf32>
    %19 = arith.addf %17, %18 : vector<4x128xf32>
    %cst_7 = arith.constant 0.0322580636 : f32
    %20 = vector.broadcast %cst_7 : f32 to vector<4x128xf32>
    %21 = arith.mulf %19, %20 : vector<4x128xf32>
    %22 = math.sqrt %21 : vector<4x128xf32>
    %cst_8 = arith.constant 9.99999997E-7 : f32
    %23 = vector.broadcast %cst_8 : f32 to vector<4x128xf32>
    %24 = arith.addf %22, %23 : vector<4x128xf32>
    %25 = tpu.reciprocal %24 : vector<4x128xf32> -> vector<4x128xf32>
    %c0_9 = arith.constant 0 : index
    %c0_10 = arith.constant 0 : index
    %26 = vector.load %arg3[%c0_9, %c0_10] : memref<1x128xf32, #tpu.memory_space<vmem>>, vector<1x128xf32>
    %27 = vector.broadcast %26 : vector<1x128xf32> to vector<4x128xf32>
    %28 = arith.mulf %25, %27 : vector<4x128xf32>
    %29 = arith.mulf %11, %28 : vector<4x128xf32>
    %c0_11 = arith.constant 0 : index
    %c0_12 = arith.constant 0 : index
    %30 = vector.load %arg4[%c0_11, %c0_12] : memref<1x128xf32, #tpu.memory_space<vmem>>, vector<1x128xf32>
    %31 = vector.broadcast %30 : vector<1x128xf32> to vector<4x128xf32>
    %32 = arith.addf %29, %31 : vector<4x128xf32>
    %c0_13 = arith.constant 0 : index
    %c0_14 = arith.constant 0 : index
    %33 = vector.load %arg1[%c0_13, %c0_14] : memref<4x128xf32, #tpu.memory_space<vmem>>, vector<4x128xf32>
    %34 = arith.addf %33, %32 : vector<4x128xf32>
    %c0_15 = arith.constant 0 : index
    %c0_16 = arith.constant 0 : index
    %35 = vector.load %arg6[%c0_15, %c0_16] : memref<4x128xf32, #tpu.memory_space<vmem>>, vector<4x128xf32>
    tpu.vector_store %arg6[%c0_15, %c0_16], %34 {strides = array<i32>} : memref<4x128xf32, #tpu.memory_space<vmem>>, vector<4x128xf32>,
    return
  }
  func.func @transform_0(%arg0: i32) -> (i32, i32) {
    %c0_i32 = arith.constant 0 : i32
    %c0_i32_0 = arith.constant 0 : i32
    return %arg0, %c0_i32 : i32, i32
  }
  func.func @transform_1(%arg0: i32) -> (i32, i32) {
    %c0_i32 = arith.constant 0 : i32
    %c0_i32_0 = arith.constant 0 : i32
    return %arg0, %c0_i32 : i32, i32
  }
  func.func @transform_2(%arg0: i32) -> (i32, i32) {
    %c0_i32 = arith.constant 0 : i32
    %c0_i32_0 = arith.constant 0 : i32
    %c0_i32_1 = arith.constant 0 : i32
    return %c0_i32, %c0_i32_0 : i32, i32
  }
  func.func @transform_3(%arg0: i32) -> (i32, i32) {
    %c0_i32 = arith.constant 0 : i32
    %c0_i32_0 = arith.constant 0 : i32
    %c0_i32_1 = arith.constant 0 : i32
    return %c0_i32, %c0_i32_0 : i32, i32
  }
  func.func @transform_4(%arg0: i32) -> (i32, i32) {
    %c0_i32 = arith.constant 0 : i32
    %c0_i32_0 = arith.constant 0 : i32
    %c0_i32_1 = arith.constant 0 : i32
    return %c0_i32, %c0_i32_0 : i32, i32
  }
  func.func @transform_5(%arg0: i32) -> (i32, i32) {
    %c0_i32 = arith.constant 0 : i32
    %c0_i32_0 = arith.constant 0 : i32
    return %arg0, %c0_i32 : i32, i32
  }
}

</mosaic_0001>

<llo_original>
// kernel: forward.3
$region0: #{forward.3}
  #allocation0 [shape = 'u32[]', space=smem, size = 0x4, offset = 0x4, fixed_abs, tag = 'smem constant byte address 0x4 - core index']
  #allocation1 [shape = 'u32[144,128]{1,0:T(1,128)}', space=vmem, size = 0x12000, scoped, tag = 'internal scratch']
  %s0 = inlined_call_operand.vmem [shape: f32[4,128], index: 0, kind: input, shape index: {}, may-alias: {0,5}]
  %s1 = inlined_call_operand.vmem [shape: f32[4,128], index: 1, kind: input, shape index: {}]
  %s2 = inlined_call_operand.vmem [shape: f32[1,128], index: 2, kind: input, shape index: {}]
  %s3 = inlined_call_operand.vmem [shape: f32[1,128], index: 3, kind: input, shape index: {}]
  %s4 = inlined_call_operand.vmem [shape: bf16[128,128], index: 4, kind: input, shape index: {}]
  %s5 = inlined_call_operand.vmem [shape: f32[4,128], index: 5, kind: output, shape index: {}, may-alias: {0,5}]
  %s6 = sld [smem:[#allocation0]]
  $region30: #{forward.3} parent=0
    _
  %s8 = ssub.s32 1, %s6
  %s9 = scalar_select 0, %s8, %s6
  // Predicated region
  $region2: #{forward.3} parent=0 // pred_check
    _
  $region3: #{forward.3} parent=0 // pred_check_branch
    %11 = sbr.rel (0) target = $region5
  $region4: #{forward.3} parent=0 // pred_region
    _
  $region5: #{forward.3} parent=0 // pred_fallthru
    _
  // Predicated region
  $region6: #{forward.3} parent=0 // pred_check
    _
  $region7: #{forward.3} parent=0 // pred_check_branch
    %13 = sbr.rel (0) target = $region9
  $region8: #{forward.3} parent=0 // pred_region
    _
  $region9: #{forward.3} parent=0 // pred_fallthru
    _
  // Predicated region
  $region10: #{forward.3} parent=0 // pred_check
    _
  $region11: #{forward.3} parent=0 // pred_check_branch
    %15 = sbr.rel (0) target = $region13
  $region12: #{forward.3} parent=0 // pred_region
    _
  $region13: #{forward.3} parent=0 // pred_fallthru
    _
  // Predicated region
  $region14: #{forward.3} parent=0 // pred_check
    _
  $region15: #{forward.3} parent=0 // pred_check_branch
    %17 = sbr.rel (0) target = $region17
  $region16: #{forward.3} parent=0 // pred_region
    _
  $region17: #{forward.3} parent=0 // pred_fallthru
    _
  // Predicated region
  $region18: #{forward.3} parent=0 // pred_check
    _
  $region19: #{forward.3} parent=0 // pred_check_branch
    %19 = sbr.rel (0) target = $region21
  $region20: #{forward.3} parent=0 // pred_region
    _
  $region21: #{forward.3} parent=0 // pred_fallthru
    _
  %v21 = vld [vmem:[%s1] sm:$0xf]
  %v22 = vld [vmem:[%s4] sm:$0xf]
  %v23 = vld [vmem:[%s4 + $0x4] sm:$0xf]
  %v24 = vld [vmem:[%s4 + $0x8] sm:$0xf]
  %v25 = vld [vmem:[%s4 + $0xc] sm:$0xf]
  %v26 = vld [vmem:[%s4 + $0x10] sm:$0xf]
  %v27 = vld [vmem:[%s4 + $0x14] sm:$0xf]
  %v28 = vld [vmem:[%s4 + $0x18] sm:$0xf]
  %v29 = vld [vmem:[%s4 + $0x1c] sm:$0xf]
  %v30 = vld [vmem:[%s4 + $0x20] sm:$0xf]
  %v31 = vld [vmem:[%s4 + $0x24] sm:$0xf]
  %v32 = vld [vmem:[%s4 + $0x28] sm:$0xf]
  %v33 = vld [vmem:[%s4 + $0x2c] sm:$0xf]
  %v34 = vld [vmem:[%s4 + $0x30] sm:$0xf]
  %v35 = vld [vmem:[%s4 + $0x34] sm:$0xf]
  %v36 = vld [vmem:[%s4 + $0x38] sm:$0xf]
  %v37 = vld [vmem:[%s4 + $0x3c] sm:$0xf]
  %v38 = vpack.c.bf16 %v21, %v21
  %v39 = vunpack.c.l.bf16 %v38
  %v40 = vsub.f32 %v21, %v39
  %v41 = vpack.c.bf16 %v40, %v40
  %v58 = vunpack.c.l.b16 %v22
  %v59 = vunpack.c.l.b16 %v23
  %v60 = vunpack.c.l.b16 %v24
  %v61 = vunpack.c.l.b16 %v25
  %v62 = vunpack.c.l.b16 %v26
  %v63 = vunpack.c.l.b16 %v27
  %v64 = vunpack.c.l.b16 %v28
  %v65 = vunpack.c.l.b16 %v29
  %v66 = vunpack.c.l.b16 %v30
  %v67 = vunpack.c.l.b16 %v31
  %v68 = vunpack.c.l.b16 %v32
  %v69 = vunpack.c.l.b16 %v33
  %v70 = vunpack.c.l.b16 %v34
  %v71 = vunpack.c.l.b16 %v35
  %v72 = vunpack.c.l.b16 %v36
  %v73 = vunpack.c.l.b16 %v37
  %v74 = vpack.c.b16 %v59, %v58
  %v75 = vpack.c.b16 %v61, %v60
  %v76 = vpack.c.b16 %v63, %v62
  %v77 = vpack.c.b16 %v65, %v64
  %v78 = vpack.c.b16 %v67, %v66
  %v79 = vpack.c.b16 %v69, %v68
  %v80 = vpack.c.b16 %v71, %v70
  %v81 = vpack.c.b16 %v73, %v72
  %90 = vmatprep.subr.bf16.mxu0 0
  %91 = vmatpush1.bf16.msra.mxu0 %v74
  %92 = vmatprep.subr.bf16.mxu0 0
  %93 = vmatpush1.bf16.msra.mxu0 %v75
  %94 = vmatprep.subr.bf16.mxu0 0
  %95 = vmatpush1.bf16.msra.mxu0 %v76
  %96 = vmatprep.subr.bf16.mxu0 0
  %97 = vmatpush1.bf16.msra.mxu0 %v77
  %98 = vmatprep.subr.bf16.mxu0 0
  %99 = vmatpush1.bf16.msra.mxu0 %v78
  %100 = vmatprep.subr.bf16.mxu0 0
  %101 = vmatpush1.bf16.msra.mxu0 %v79
  %102 = vmatprep.subr.bf16.mxu0 0
  %103 = vmatpush1.bf16.msra.mxu0 %v80
  %104 = vmatprep.subr.bf16.mxu0 0
  %105 = vmatpush1.bf16.msra.mxu0 %v81
  %106 = vmatprep.subr.bf16.mxu0 0
  %107 = vmatpush1.bf16.msra.mxu0 0
  %108 = vmatprep.subr.bf16.mxu0 0
  %109 = vmatpush1.bf16.msra.mxu0 0
  %110 = vmatprep.subr.bf16.mxu0 0
  %111 = vmatpush1.bf16.msra.mxu0 0
  %112 = vmatprep.subr.bf16.mxu0 0
  %113 = vmatpush1.bf16.msra.mxu0 0
  %114 = vmatprep.subr.bf16.mxu0 0
  %115 = vmatpush1.bf16.msra.mxu0 0
  %116 = vmatprep.subr.bf16.mxu0 0
  %117 = vmatpush1.bf16.msra.mxu0 0
  %118 = vmatprep.subr.bf16.mxu0 0
  %119 = vmatpush1.bf16.msra.mxu0 0
  %120 = vmatprep.subr.bf16.mxu0 0
  %121 = vmatpush1.bf16.msra.mxu0 0
  %122 = vmatprep.mubr.bf16.mxu0 0
  %123 = vmatmul.mubr.bf16.gmra.mrb[0].mxu0 %v41
  %v124 = vpop.f32.mrb[0].mxu0
  %v125 = vadd.f32 0.0, %v124
  %v126 = vpop.f32.mrb[0].mxu0
  %v127 = vpop.f32.mrb[0].mxu0
  %v128 = vpop.f32.mrb[0].mxu0
  %129 = vdwg.mxu0
  %130 = vmatprep.subr.bf16.mxu0 0
  %131 = vmatpush1.bf16.msra.mxu0 %v74
  %132 = vmatprep.subr.bf16.mxu0 0
  %133 = vmatpush1.bf16.msra.mxu0 %v75
  %134 = vmatprep.subr.bf16.mxu0 0
  %135 = vmatpush1.bf16.msra.mxu0 %v76
  %136 = vmatprep.subr.bf16.mxu0 0
  %137 = vmatpush1.bf16.msra.mxu0 %v77
  %138 = vmatprep.subr.bf16.mxu0 0
  %139 = vmatpush1.bf16.msra.mxu0 %v78
  %140 = vmatprep.subr.bf16.mxu0 0
  %141 = vmatpush1.bf16.msra.mxu0 %v79
  %142 = vmatprep.subr.bf16.mxu0 0
  %143 = vmatpush1.bf16.msra.mxu0 %v80
  %144 = vmatprep.subr.bf16.mxu0 0
  %145 = vmatpush1.bf16.msra.mxu0 %v81
  %146 = vmatprep.subr.bf16.mxu0 0
  %147 = vmatpush1.bf16.msra.mxu0 0
  %148 = vmatprep.subr.bf16.mxu0 0
  %149 = vmatpush1.bf16.msra.mxu0 0
  %150 = vmatprep.subr.bf16.mxu0 0
  %151 = vmatpush1.bf16.msra.mxu0 0
  %152 = vmatprep.subr.bf16.mxu0 0
  %153 = vmatpush1.bf16.msra.mxu0 0
  %154 = vmatprep.subr.bf16.mxu0 0
  %155 = vmatpush1.bf16.msra.mxu0 0
  %156 = vmatprep.subr.bf16.mxu0 0
  %157 = vmatpush1.bf16.msra.mxu0 0
  %158 = vmatprep.subr.bf16.mxu0 0
  %159 = vmatpush1.bf16.msra.mxu0 0
  %160 = vmatprep.subr.bf16.mxu0 0
  %161 = vmatpush1.bf16.msra.mxu0 0
  %162 = vmatprep.mubr.bf16.mxu0 0
  %163 = vmatmul.mubr.bf16.gmra.mrb[0].mxu0 %v38
  %v164 = vpop.f32.mrb[0].mxu0
  %v165 = vadd.f32 %v125, %v164
  %v166 = vpop.f32.mrb[0].mxu0
  %v167 = vpop.f32.mrb[0].mxu0
  %v168 = vpop.f32.mrb[0].mxu0
  %169 = vdwg.mxu0
  %v170 = vmul.f32 %v165, 0.03125
  %v171 = vsub.f32 %v21, %v170
  %v172 = vmul.f32 %v171, %v171
  %v173 = vpack.c.bf16 %v172, %v172
  %v174 = vunpack.c.l.bf16 %v173
  %v175 = vsub.f32 %v172, %v174
  %v176 = vpack.c.bf16 %v175, %v175
  %177 = vmatprep.subr.bf16.mxu0 0
  %178 = vmatpush1.bf16.msra.mxu0 %v74
  %179 = vmatprep.subr.bf16.mxu0 0
  %180 = vmatpush1.bf16.msra.mxu0 %v75
  %181 = vmatprep.subr.bf16.mxu0 0
  %182 = vmatpush1.bf16.msra.mxu0 %v76
  %183 = vmatprep.subr.bf16.mxu0 0
  %184 = vmatpush1.bf16.msra.mxu0 %v77
  %185 = vmatprep.subr.bf16.mxu0 0
  %186 = vmatpush1.bf16.msra.mxu0 %v78
  %187 = vmatprep.subr.bf16.mxu0 0
  %188 = vmatpush1.bf16.msra.mxu0 %v79
  %189 = vmatprep.subr.bf16.mxu0 0
  %190 = vmatpush1.bf16.msra.mxu0 %v80
  %191 = vmatprep.subr.bf16.mxu0 0
  %192 = vmatpush1.bf16.msra.mxu0 %v81
  %193 = vmatprep.subr.bf16.mxu0 0
  %194 = vmatpush1.bf16.msra.mxu0 0
  %195 = vmatprep.subr.bf16.mxu0 0
  %196 = vmatpush1.bf16.msra.mxu0 0
  %197 = vmatprep.subr.bf16.mxu0 0
  %198 = vmatpush1.bf16.msra.mxu0 0
  %199 = vmatprep.subr.bf16.mxu0 0
  %200 = vmatpush1.bf16.msra.mxu0 0
  %201 = vmatprep.subr.bf16.mxu0 0
  %202 = vmatpush1.bf16.msra.mxu0 0
  %203 = vmatprep.subr.bf16.mxu0 0
  %204 = vmatpush1.bf16.msra.mxu0 0
  %205 = vmatprep.subr.bf16.mxu0 0
  %206 = vmatpush1.bf16.msra.mxu0 0
  %207 = vmatprep.subr.bf16.mxu0 0
  %208 = vmatpush1.bf16.msra.mxu0 0
  %209 = vmatprep.mubr.bf16.mxu0 0
  %210 = vmatmul.mubr.bf16.gmra.mrb[0].mxu0 %v176
  %v211 = vpop.f32.mrb[0].mxu0
  %v212 = vadd.f32 0.0, %v211
  %v213 = vpop.f32.mrb[0].mxu0
  %v214 = vpop.f32.mrb[0].mxu0
  %v215 = vpop.f32.mrb[0].mxu0
  %216 = vdwg.mxu0
  %217 = vmatprep.subr.bf16.mxu0 0
  %218 = vmatpush1.bf16.msra.mxu0 %v74
  %219 = vmatprep.subr.bf16.mxu0 0
  %220 = vmatpush1.bf16.msra.mxu0 %v75
  %221 = vmatprep.subr.bf16.mxu0 0
  %222 = vmatpush1.bf16.msra.mxu0 %v76
  %223 = vmatprep.subr.bf16.mxu0 0
  %224 = vmatpush1.bf16.msra.mxu0 %v77
  %225 = vmatprep.subr.bf16.mxu0 0
  %226 = vmatpush1.bf16.msra.mxu0 %v78
  %227 = vmatprep.subr.bf16.mxu0 0
  %228 = vmatpush1.bf16.msra.mxu0 %v79
  %229 = vmatprep.subr.bf16.mxu0 0
  %230 = vmatpush1.bf16.msra.mxu0 %v80
  %231 = vmatprep.subr.bf16.mxu0 0
  %232 = vmatpush1.bf16.msra.mxu0 %v81
  %233 = vmatprep.subr.bf16.mxu0 0
  %234 = vmatpush1.bf16.msra.mxu0 0
  %235 = vmatprep.subr.bf16.mxu0 0
  %236 = vmatpush1.bf16.msra.mxu0 0
  %237 = vmatprep.subr.bf16.mxu0 0
  %238 = vmatpush1.bf16.msra.mxu0 0
  %239 = vmatprep.subr.bf16.mxu0 0
  %240 = vmatpush1.bf16.msra.mxu0 0
  %241 = vmatprep.subr.bf16.mxu0 0
  %242 = vmatpush1.bf16.msra.mxu0 0
  %243 = vmatprep.subr.bf16.mxu0 0
  %244 = vmatpush1.bf16.msra.mxu0 0
  %245 = vmatprep.subr.bf16.mxu0 0
  %246 = vmatpush1.bf16.msra.mxu0 0
  %247 = vmatprep.subr.bf16.mxu0 0
  %248 = vmatpush1.bf16.msra.mxu0 0
  %249 = vmatprep.mubr.bf16.mxu0 0
  %250 = vmatmul.mubr.bf16.gmra.mrb[0].mxu0 %v173
  %v251 = vpop.f32.mrb[0].mxu0
  %v252 = vadd.f32 %v212, %v251
  %v253 = vpop.f32.mrb[0].mxu0
  %v254 = vpop.f32.mrb[0].mxu0
  %v255 = vpop.f32.mrb[0].mxu0
  %256 = vdwg.mxu0
  %v257 = vmul.f32 %v252, 0.032258064
  %v258 = vrsqrt.pop %v257
  %v259 = vmul.f32 %v257, %v258
  %vm260 = vcmp.eq.f32.partialorder %v257, inf
  %v261 = vsel %vm260, %v257, %v259
  %vm262 = vcmp.eq.f32.partialorder %v257, 0.0
  %v263 = vand.u32 %v257, 2147483648
  %v264 = vsel %vm262, %v263, %v261
  %v265 = vadd.f32 %v264, 1e-06
  %v266 = vrcp.pop %v265
  %v267 = vld [vmem:[%s2] sm:$0x1]
  %v269 = vlaneseq
  %v270 = vshrl.u32 %v269, 7
  %v271 = vsub.s32 0, %v270
  %v272 = vrot.slane %v267, %v271
  %v274 = vmul.f32 %v266, %v272
  %v275 = vmul.f32 %v171, %v274
  %v276 = vld [vmem:[%s3] sm:$0x1]
  %v278 = vlaneseq
  %v279 = vshrl.u32 %v278, 7
  %v280 = vsub.s32 0, %v279
  %v281 = vrot.slane %v276, %v280
  %v283 = vadd.f32 %v275, %v281
  %v284 = vld [vmem:[%s0] sm:$0xf]
  %v285 = vadd.f32 %v284, %v283
  %286 = vst [vmem:[%s5] sm:$0xf] %v285
  // Predicated region
  $region22: #{forward.3} parent=0 // pred_check
    _
  $region23: #{forward.3} parent=0 // pred_check_branch
    %288 = sbr.rel (0) target = $region25
  $region24: #{forward.3} parent=0 // pred_region
    _
  $region25: #{forward.3} parent=0 // pred_fallthru
    _
  // Predicated region
  $region26: #{forward.3} parent=0 // pred_check
    _
  $region27: #{forward.3} parent=0 // pred_check_branch
    %290 = sbr.rel (0) target = $region29
  $region28: #{forward.3} parent=0 // pred_region
    _
  $region29: #{forward.3} parent=0 // pred_fallthru
    _

</llo_original>
